<compile_context>
chip_gen: v5e
topology: v5e:2x2
jax: 0.10.0
libtpu: 0.0.40
codegen_flags: <defaults>
</compile_context>

<pallas_src>
import functools

import jax
import jax.numpy as jnp
from jax.experimental import pallas as pl
from jax.experimental.pallas import tpu as pltpu

IGNORE_INDEX = 255


def _ce_partial_kernel(logits_ref, target_ref, sum_ref, cnt_ref, *, total_pixels):
    # logits_ref: (1, C, tile_s, 128)   target_ref: (1, tile_s, 128) int32
    # sum_ref / cnt_ref: (1, 8, 128) f32 lane-parallel accumulators (one pair per image).
    i = pl.program_id(1)

    @pl.when(i == 0)
    def _():
        sum_ref[...] = jnp.zeros_like(sum_ref)
        cnt_ref[...] = jnp.zeros_like(cnt_ref)

    x = logits_ref[0].astype(jnp.float32)          # (C, S, 128)
    t = target_ref[0]                              # (S, 128) int32
    C, S, L = x.shape

    # Stable log-softmax over the class axis (axis 0 => slab-wise VPU max/add).
    m = jnp.max(x, axis=0, keepdims=True)                          # (1, S, 128)
    lse = m[0] + jnp.log(jnp.sum(jnp.exp(x - m), axis=0))          # (S, 128)

    # Gather the target-class logit via one-hot select (no dynamic gather).
    cls_iota = jax.lax.broadcasted_iota(jnp.int32, x.shape, 0)     # (C, S, 128)
    picked = jnp.sum(jnp.where(cls_iota == t[None], x, 0.0), axis=0)   # (S, 128)

    ce = lse - picked                                              # per-pixel -log p_target

    # Valid = not ignore_index AND inside the original (unpadded) pixel range.
    sub_iota = jax.lax.broadcasted_iota(jnp.int32, (S, L), 0)
    lane_iota = jax.lax.broadcasted_iota(jnp.int32, (S, L), 1)
    pix = (i * S + sub_iota) * L + lane_iota
    valid = (t != IGNORE_INDEX) & (pix < total_pixels)

    ce_m = jnp.where(valid, ce, 0.0)
    cnt_m = valid.astype(jnp.float32)

    # Fold (S,128) -> (8,128) with pure elementwise (slab-wise) adds; defer the final
    # cross-lane reduction to the JAX epilogue.
    sum_ref[0] += jnp.sum(ce_m.reshape(S // 8, 8, L), axis=0)
    cnt_ref[0] += jnp.sum(cnt_m.reshape(S // 8, 8, L), axis=0)


def focal_loss(output_nchw, target_nhw, gamma=2.0, ignore_index=IGNORE_INDEX,
               reduction="mean", vmem_budget_bytes=8 * 1024 * 1024):
    """output_nchw: (N, C, H, W) float logits (f32 or bf16); target_nhw: (N, H, W) int ids."""
    assert ignore_index == IGNORE_INDEX
    N, C, H, W = output_nchw.shape
    P = H * W

    # Free, contiguous reshapes only (no HBM transpose of the big logits tensor).
    logits = output_nchw.reshape(N, C, P)
    target = target_nhw.reshape(N, P).astype(jnp.int32)

    # Pad the pixel axis (only if needed) to a multiple of 8*128 so it maps cleanly
    # onto (sublane, lane); padded pixels are excluded via the in-bounds mask.
    P_pad = -(-P // 1024) * 1024
    if P_pad != P:
        logits = jnp.pad(logits, ((0, 0), (0, 0), (0, P_pad - P)))
        target = jnp.pad(target, ((0, 0), (0, P_pad - P)),
                         constant_values=IGNORE_INDEX)
    s_total = P_pad // 128
    logits = logits.reshape(N, C, s_total, 128)
    target = target.reshape(N, s_total, 128)

    # Biggest block whose double-buffered inputs fit a conservative VMEM budget
    # (default 8 MiB: safe on v5e's 16 MiB scoped default; v6e/v7x default 32 MiB).
    itemsize = output_nchw.dtype.itemsize
    per_s_bytes = 128 * (C * itemsize + 4)            # logits row + int32 target row
    tile_s = max(8, (vmem_budget_bytes // (2 * per_s_bytes)) // 8 * 8)
    tile_s = int(min(tile_s, s_total))
    num_tiles = pl.cdiv(s_total, tile_s)

    cost = pl.CostEstimate(
        flops=int(N * P * (4 * C + 8)),
        transcendentals=int(N * P * (C + 1)),
        bytes_accessed=int(N * P * (C * itemsize + 4) + 2 * N * 8 * 128 * 4),
    )

    kernel = functools.partial(_ce_partial_kernel, total_pixels=P)

    sums, cnts = pl.pallas_call(
        kernel,
        out_shape=(
            jax.ShapeDtypeStruct((N, 8, 128), jnp.float32),
            jax.ShapeDtypeStruct((N, 8, 128), jnp.float32),
        ),
        grid_spec=pltpu.PrefetchScalarGridSpec(
            num_scalar_prefetch=0,
            grid=(N, num_tiles),
            in_specs=[
                pl.BlockSpec((1, C, tile_s, 128), lambda n, i: (n, 0, i, 0)),
                pl.BlockSpec((1, tile_s, 128), lambda n, i: (n, i, 0)),
            ],
            out_specs=[
                pl.BlockSpec((1, 8, 128), lambda n, i: (n, 0, 0)),
                pl.BlockSpec((1, 8, 128), lambda n, i: (n, 0, 0)),
            ],
        ),
        compiler_params=pltpu.CompilerParams(
            dimension_semantics=("parallel", "arbitrary"),  # batch axis parallel (v7x 2 TCs)
        ),
        cost_estimate=cost,
    )(logits, target)

    total = jnp.sum(sums)
    count = jnp.sum(cnts)

    if reduction == "mean":
        logpt = total / count          # CrossEntropyLoss(reduction='mean', ignore_index)
    else:
        logpt = total                  # reduction='sum'

    pt = jnp.exp(-logpt)
    loss = (1.0 - pt) ** gamma * logpt
    return loss                        # scalar; .mean()/.sum() of a scalar is itself


def _focal_loss_ref(output_nchw, target_nhw, gamma=2.0):
    # Pure-JAX reference of the PyTorch module (reduction='mean').
    N, C, H, W = output_nchw.shape
    x = jnp.transpose(output_nchw, (0, 2, 3, 1)).reshape(-1, C).astype(jnp.float32)
    t = target_nhw.reshape(-1)
    lse = jax.nn.logsumexp(x, axis=-1)
    safe_t = jnp.where(t == IGNORE_INDEX, 0, t)
    picked = jnp.take_along_axis(x, safe_t[:, None], axis=-1)[:, 0]
    ce = lse - picked
    valid = (t != IGNORE_INDEX)
    logpt = jnp.sum(jnp.where(valid, ce, 0.0)) / jnp.sum(valid.astype(jnp.float32))
    pt = jnp.exp(-logpt)
    return (1.0 - pt) ** gamma * logpt


if __name__ == "__main__":
    key = jax.random.PRNGKey(0)
    k1, k2, k3 = jax.random.split(key, 3)

    N, C, H, W = 2, 4, 16, 16
    output = jax.random.normal(k1, (N, C, H, W), dtype=jnp.float32)
    target = jax.random.randint(k2, (N, H, W), 0, C, dtype=jnp.int32)
    # sprinkle some ignore_index pixels to exercise the masked reduction
    ignore_mask = jax.random.bernoulli(k3, 0.1, (N, H, W))
    target = jnp.where(ignore_mask, IGNORE_INDEX, target)

    loss = jax.block_until_ready(focal_loss(output, target, gamma=2.0))
    ref = _focal_loss_ref(output, target, gamma=2.0)
    assert jnp.allclose(loss, ref, rtol=1e-5, atol=1e-5), (loss, ref)

    # Tail / padding path: spatial size not a multiple of 128.
    N2, C2, H2, W2 = 2, 5, 7, 9
    out2 = jax.random.normal(k1, (N2, C2, H2, W2), dtype=jnp.float32)
    tgt2 = jax.random.randint(k2, (N2, H2, W2), 0, C2, dtype=jnp.int32)
    tgt2 = jnp.where(jax.random.bernoulli(k3, 0.1, (N2, H2, W2)), IGNORE_INDEX, tgt2)
    loss2 = jax.block_until_ready(focal_loss(out2, tgt2, gamma=2.0))
    ref2 = _focal_loss_ref(out2, tgt2, gamma=2.0)
    assert jnp.allclose(loss2, ref2, rtol=1e-5, atol=1e-5), (loss2, ref2)

    print("KERNEL_OK")
</pallas_src>

<mosaic_0001>
module attributes {stable_mosaic.version = 11 : i64} {
  func.func @_ce_partial_kernel(%arg0: i32, %arg1: i32, %arg2: memref<1x4x8x128xf32, #tpu.memory_space<vmem>>, %arg3: memref<1x8x128xi32, #tpu.memory_space<vmem>>, %arg4: memref<1x8x128xf32, #tpu.memory_space<vmem>>, %arg5: memref<1x8x128xf32, #tpu.memory_space<vmem>>) attributes {dimension_semantics = [#tpu.dimension_semantics<parallel>, #tpu.dimension_semantics<arbitrary>], iteration_bounds = array<i64: 2, 1>, scalar_prefetch = 0 : i64, scratch_operands = 0 : i64, tpu.core_type = #tpu.core_type<tc>, window_params = [{transform_indices = @transform_0, window_bounds = array<i64: 1, 4, 8, 128>}, {transform_indices = @transform_1, window_bounds = array<i64: 1, 8, 128>}, {transform_indices = @transform_2, window_bounds = array<i64: 1, 8, 128>}, {transform_indices = @transform_3, window_bounds = array<i64: 1, 8, 128>}]} {
    %c0_i32 = arith.constant 0 : i32
    %0 = arith.cmpi eq, %arg1, %c0_i32 : i32
    %1 = arith.extui %0 : i1 to i32
    %c0_i32_0 = arith.constant 0 : i32
    %2 = arith.cmpi ne, %1, %c0_i32_0 : i32
    scf.if %2 {
      %cst_25 = arith.constant 0.000000e+00 : f32
      %57 = vector.broadcast %cst_25 : f32 to vector<1x8x128xf32>
      %c0_26 = arith.constant 0 : index
      %c0_27 = arith.constant 0 : index
      %c0_28 = arith.constant 0 : index
      %58 = vector.load %arg4[%c0_26, %c0_27, %c0_28] : memref<1x8x128xf32, #tpu.memory_space<vmem>>, vector<1x8x128xf32>
      tpu.vector_store %arg4[%c0_26, %c0_27, %c0_28], %57 {strides = array<i32>} : memref<1x8x128xf32, #tpu.memory_space<vmem>>, vector<1x8x128xf32>,
      %cst_29 = arith.constant 0.000000e+00 : f32
      %59 = vector.broadcast %cst_29 : f32 to vector<1x8x128xf32>
      %c0_30 = arith.constant 0 : index
      %c0_31 = arith.constant 0 : index
      %c0_32 = arith.constant 0 : index
      %60 = vector.load %arg5[%c0_30, %c0_31, %c0_32] : memref<1x8x128xf32, #tpu.memory_space<vmem>>, vector<1x8x128xf32>
      tpu.vector_store %arg5[%c0_30, %c0_31, %c0_32], %59 {strides = array<i32>} : memref<1x8x128xf32, #tpu.memory_space<vmem>>, vector<1x8x128xf32>,
    } else {
    }
    %c0 = arith.constant 0 : index
    %c0_1 = arith.constant 0 : index
    %c0_2 = arith.constant 0 : index
    %c0_3 = arith.constant 0 : index
    %3 = vector.load %arg2[%c0, %c0_1, %c0_2, %c0_3] : memref<1x4x8x128xf32, #tpu.memory_space<vmem>>, vector<1x4x8x128xf32>
    %4 = vector.shape_cast %3 : vector<1x4x8x128xf32> to vector<4x8x128xf32>
    %c0_4 = arith.constant 0 : index
    %c0_5 = arith.constant 0 : index
    %c0_6 = arith.constant 0 : index
    %5 = vector.load %arg3[%c0_4, %c0_5, %c0_6] : memref<1x8x128xi32, #tpu.memory_space<vmem>>, vector<1x8x128xi32>
    %6 = vector.shape_cast %5 : vector<1x8x128xi32> to vector<8x128xi32>
    %cst = arith.constant dense<0xFF800000> : vector<8x128xf32>
    %7 = vector.multi_reduction <maximumf>, %4, %cst [0] : vector<4x8x128xf32> to vector<8x128xf32>
    %8 = vector.shape_cast %7 : vector<8x128xf32> to vector<1x8x128xf32>
    %9 = vector.shape_cast %8 : vector<1x8x128xf32> to vector<8x128xf32>
    %10 = vector.broadcast %8 : vector<1x8x128xf32> to vector<4x8x128xf32>
    %11 = arith.subf %4, %10 : vector<4x8x128xf32>
    %12 = math.exp %11 : vector<4x8x128xf32>
    %cst_7 = arith.constant dense<0.000000e+00> : vector<8x128xf32>
    %13 = vector.multi_reduction <add>, %12, %cst_7 [0] : vector<4x8x128xf32> to vector<8x128xf32>
    %14 = math.log %13 : vector<8x128xf32>
    %15 = arith.addf %9, %14 : vector<8x128xf32>
    %16 = tpu.iota {dimensions = array<i32: 0>} : vector<4x8x128xi32>
    %17 = vector.shape_cast %6 : vector<8x128xi32> to vector<1x8x128xi32>
    %18 = vector.broadcast %17 : vector<1x8x128xi32> to vector<4x8x128xi32>
    %19 = arith.cmpi eq, %16, %18 : vector<4x8x128xi32>
    %cst_8 = arith.constant 0.000000e+00 : f32
    %20 = vector.broadcast %cst_8 : f32 to vector<4x8x128xf32>
    %21 = arith.select %19, %4, %20 : vector<4x8x128xi1>, vector<4x8x128xf32>
    %cst_9 = arith.constant dense<0.000000e+00> : vector<8x128xf32>
    %22 = vector.multi_reduction <add>, %21, %cst_9 [0] : vector<4x8x128xf32> to vector<8x128xf32>
    %23 = arith.subf %15, %22 : vector<8x128xf32>
    %24 = tpu.iota {dimensions = array<i32: 0>} : vector<8x128xi32>
    %25 = tpu.iota {dimensions = array<i32: 1>} : vector<8x128xi32>
    %c8_i32 = arith.constant 8 : i32
    %26 = arith.muli %arg1, %c8_i32 : i32
    %27 = vector.broadcast %26 : i32 to vector<8x128xi32>
    %28 = arith.addi %27, %24 : vector<8x128xi32>
    %c128_i32 = arith.constant 128 : i32
    %29 = vector.broadcast %c128_i32 : i32 to vector<8x128xi32>
    %30 = arith.muli %28, %29 : vector<8x128xi32>
    %31 = arith.addi %30, %25 : vector<8x128xi32>
    %c255_i32 = arith.constant 255 : i32
    %32 = vector.broadcast %c255_i32 : i32 to vector<8x128xi32>
    %33 = arith.cmpi ne, %6, %32 : vector<8x128xi32>
    %c256_i32 = arith.constant 256 : i32
    %34 = vector.broadcast %c256_i32 : i32 to vector<8x128xi32>
    %35 = arith.cmpi slt, %31, %34 : vector<8x128xi32>
    %36 = arith.andi %33, %35 : vector<8x128xi1>
    %cst_10 = arith.constant 0.000000e+00 : f32
    %37 = vector.broadcast %cst_10 : f32 to vector<8x128xf32>
    %38 = arith.select %36, %23, %37 : vector<8x128xi1>, vector<8x128xf32>
    %39 = arith.extui %36 : vector<8x128xi1> to vector<8x128xi32>
    %40 = arith.sitofp %39 : vector<8x128xi32> to vector<8x128xf32>
    %c0_11 = arith.constant 0 : index
    %c0_12 = arith.constant 0 : index
    %c0_13 = arith.constant 0 : index
    %41 = vector.load %arg4[%c0_11, %c0_12, %c0_13] : memref<1x8x128xf32, #tpu.memory_space<vmem>>, vector<1x8x128xf32>
    %42 = vector.shape_cast %41 : vector<1x8x128xf32> to vector<8x128xf32>
    %43 = vector.shape_cast %38 : vector<8x128xf32> to vector<1x8x128xf32>
    %cst_14 = arith.constant dense<0.000000e+00> : vector<8x128xf32>
    %44 = vector.multi_reduction <add>, %43, %cst_14 [0] : vector<1x8x128xf32> to vector<8x128xf32>
    %45 = arith.addf %42, %44 : vector<8x128xf32>
    %c0_15 = arith.constant 0 : index
    %c0_16 = arith.constant 0 : index
    %c0_17 = arith.constant 0 : index
    %46 = vector.load %arg4[%c0_15, %c0_16, %c0_17] : memref<1x8x128xf32, #tpu.memory_space<vmem>>, vector<1x8x128xf32>
    %47 = vector.shape_cast %46 : vector<1x8x128xf32> to vector<8x128xf32>
    %48 = vector.shape_cast %45 : vector<8x128xf32> to vector<1x8x128xf32>
    tpu.vector_store %arg4[%c0_15, %c0_16, %c0_17], %48 {strides = array<i32>} : memref<1x8x128xf32, #tpu.memory_space<vmem>>, vector<1x8x128xf32>,
    %c0_18 = arith.constant 0 : index
    %c0_19 = arith.constant 0 : index
    %c0_20 = arith.constant 0 : index
    %49 = vector.load %arg5[%c0_18, %c0_19, %c0_20] : memref<1x8x128xf32, #tpu.memory_space<vmem>>, vector<1x8x128xf32>
    %50 = vector.shape_cast %49 : vector<1x8x128xf32> to vector<8x128xf32>
    %51 = vector.shape_cast %40 : vector<8x128xf32> to vector<1x8x128xf32>
    %cst_21 = arith.constant dense<0.000000e+00> : vector<8x128xf32>
    %52 = vector.multi_reduction <add>, %51, %cst_21 [0] : vector<1x8x128xf32> to vector<8x128xf32>
    %53 = arith.addf %50, %52 : vector<8x128xf32>
    %c0_22 = arith.constant 0 : index
    %c0_23 = arith.constant 0 : index
    %c0_24 = arith.constant 0 : index
    %54 = vector.load %arg5[%c0_22, %c0_23, %c0_24] : memref<1x8x128xf32, #tpu.memory_space<vmem>>, vector<1x8x128xf32>
    %55 = vector.shape_cast %54 : vector<1x8x128xf32> to vector<8x128xf32>
    %56 = vector.shape_cast %53 : vector<8x128xf32> to vector<1x8x128xf32>
    tpu.vector_store %arg5[%c0_22, %c0_23, %c0_24], %56 {strides = array<i32>} : memref<1x8x128xf32, #tpu.memory_space<vmem>>, vector<1x8x128xf32>,
    return
  }
  func.func @transform_0(%arg0: i32, %arg1: i32) -> (i32, i32, i32, i32) {
    %c0_i32 = arith.constant 0 : i32
    %c0_i32_0 = arith.constant 0 : i32
    %c0_i32_1 = arith.constant 0 : i32
    return %arg0, %c0_i32, %arg1, %c0_i32_0 : i32, i32, i32, i32
  }
  func.func @transform_1(%arg0: i32, %arg1: i32) -> (i32, i32, i32) {
    %c0_i32 = arith.constant 0 : i32
    %c0_i32_0 = arith.constant 0 : i32
    return %arg0, %arg1, %c0_i32 : i32, i32, i32
  }
  func.func @transform_2(%arg0: i32, %arg1: i32) -> (i32, i32, i32) {
    %c0_i32 = arith.constant 0 : i32
    %c0_i32_0 = arith.constant 0 : i32
    %c0_i32_1 = arith.constant 0 : i32
    return %arg0, %c0_i32, %c0_i32_0 : i32, i32, i32
  }
  func.func @transform_3(%arg0: i32, %arg1: i32) -> (i32, i32, i32) {
    %c0_i32 = arith.constant 0 : i32
    %c0_i32_0 = arith.constant 0 : i32
    %c0_i32_1 = arith.constant 0 : i32
    return %arg0, %c0_i32, %c0_i32_0 : i32, i32, i32
  }
}

</mosaic_0001>

<llo_original>
// kernel: tpu_custom_call.1
$region0: #{tpu_custom_call.1}
  #allocation0 [shape = 'u32[]', space=smem, size = 0x4, offset = 0x4, fixed_abs, tag = 'smem constant byte address 0x4 - core index']
  #allocation1 [shape = 'u32[72,128]{1,0:T(1,128)}', space=vmem, size = 0x9000, scoped, tag = 'internal scratch']
  %s0 = inlined_call_operand.hbm [shape: f32[2,4,8,128], index: 0, kind: input, shape index: {}]
  %s1 = inlined_call_operand.hbm [shape: s32[2,8,128], index: 1, kind: input, shape index: {}]
  %s2 = inlined_call_operand.hbm [shape: f32[2,8,128], index: 2, kind: output, shape index: {0}]
  %s3 = inlined_call_operand.hbm [shape: f32[2,8,128], index: 3, kind: output, shape index: {1}]
  %4 = xla_tuple %s2, %s3
  %s5 = sld [smem:[#allocation0]]
  $region61: #{tpu_custom_call.1} parent=0
    _
  %s7 = ssub.s32 1, %s5
  %s8 = scalar_select 0, %s7, %s5
  $region1: #{tpu_custom_call.1} parent=0
    #allocation2 [shape = 'u8[32768]{0}', space=vmem, size = 0x8000, scoped, tag = 'input window, operand 0']
    #allocation3 [shape = 's32[2]{0}', space=sflag, size = 0x8, scoped, tag = 'scoped memory for tpu_custom_call.1']
    #allocation4 [shape = 's32[2]{0}', space=sflag, size = 0x8, scoped, tag = 'scoped memory for tpu_custom_call.1']
    #allocation5 [shape = 'u8[8192]{0}', space=vmem, size = 0x2000, scoped, tag = 'input window, operand 1']
    #allocation6 [shape = 's32[2]{0}', space=sflag, size = 0x8, scoped, tag = 'scoped memory for tpu_custom_call.1']
    #allocation7 [shape = 'u8[8192]{0}', space=vmem, size = 0x2000, scoped, tag = 'output window, operand 0']
    #allocation8 [shape = 'u8[8192]{0}', space=vmem, size = 0x2000, scoped, tag = 'output window, operand 1']
    #allocation9 [shape = 's32[2]{0}', space=sflag, size = 0x8, scoped, tag = 'scoped memory for tpu_custom_call.1']
    %9 = vsyncpa [#allocation3], 0
    %s10 = scalar_lea.sflag [#allocation3], 1
    %11 = vsyncpa %s10, 0
    %12 = vsyncpa [#allocation6], 0
    %s13 = scalar_lea.sflag [#allocation6], 1
    %14 = vsyncpa %s13, 0
    %15 = vsyncpa [#allocation4], 0
    %s16 = scalar_lea.sflag [#allocation4], 1
    %17 = vsyncpa %s16, 0
    %18 = vsyncpa [#allocation9], 0
    %s19 = scalar_lea.sflag [#allocation9], 1
    %20 = vsyncpa %s19, 0
    loop: start=0, step=1, limit=4
    $region2: #{tpu_custom_call.1} parent=1 // loop_pre_header
      _
    $region3: #{tpu_custom_call.1} parent=1 // loop_header
      %s22 = sphi 0, %s26
      %p23 = scmp.ge.s32.totalorder %s22, 4
      %s29 = sphi 0, %s41
      %s30 = sphi 0, %s37
      %s31 = sphi 0, %s29
      %s32 = sphi 0, %s30
      %s33 = sphi 0, %s31
      %s34 = sphi 0, %s32
      %s46 = sphi 0, %s48
      %s49 = sphi 0, %s46
      %s50 = sphi 0, %s49
      %s66 = sphi 0, %s50
      %s74 = sphi 0, %s76
      %s77 = sphi 0, %s74
      %s78 = sphi 0, %s77
      %s94 = sphi 0, %s78
      %s100 = sphi 0, %s102
      %s103 = sphi 0, %s100
      %s104 = sphi 0, %s103
      %s120 = sphi 0, %s104
      %s126 = sphi 0, %s128
      %s129 = sphi 0, %s126
      %s130 = sphi 0, %s129
      %s146 = sphi 0, %s130
    $region4: #{tpu_custom_call.1} parent=1 // loop_header_branch
      %25 = sbr.rel (%p23) target = $region8
    $region5: #{tpu_custom_call.1} parent=1 // loop_body
      %s27 = ssub.s32 %s22, 1
      %s28 = ssub.s32 %s22, 2
      %s35 = sadd.s32 1, %s30
      %p36 = scmp.ge.s32.totalorder %s35, 1
      %s37 = scalar_select %p36, 0, %s35
      %s38 = sadd.s32 1, %s29
      %s39 = scalar_select %p36, %s38, %s29
      %p40 = scmp.ge.s32.totalorder %s39, 2
      %s41 = scalar_select %p40, 0, %s39
      %s42 = ssub.s32 %s29, %s41
      %s43 = ssub.s32 %s30, %s37
      %s44 = sor.u32 %s42, %s43
      %p45 = scmp.eq.s32.totalorder %s44, 0
      %s47 = sadd.s32 %s46, 1
      %s48 = scalar_select %p45, %s46, %s47
      %p51 = pneg %p45
      %p52 = scmp.eq.s32.totalorder %s22, 1
      %p53 = por %p51, %p52
      %p54 = scmp.ne.s32.totalorder %s46, %s49
      %p55 = scmp.eq.s32.totalorder %s22, 0
      %p56 = por %p54, %p55
      %p57 = scmp.ne.s32.totalorder %s46, %s49
      %p58 = scmp.eq.s32.totalorder %s27, 1
      %p59 = por %p57, %p58
      %p60 = scmp.ne.s32.totalorder %s49, %s50
      %p61 = scmp.eq.s32.totalorder %s27, 0
      %p62 = por %p60, %p61
      %p63 = scmp.ne.s32.totalorder %s49, %s50
      %p64 = scmp.eq.s32.totalorder %s28, 1
      %p65 = por %p63, %p64
      %p67 = scmp.ne.s32.totalorder %s50, %s66
      %p68 = scmp.eq.s32.totalorder %s28, 0
      %p69 = por %p67, %p68
      %s70 = ssub.s32 %s29, %s41
      %s71 = ssub.s32 %s30, %s37
      %s72 = sor.u32 %s70, %s71
      %p73 = scmp.eq.s32.totalorder %s72, 0
      %s75 = sadd.s32 %s74, 1
      %s76 = scalar_select %p73, %s74, %s75
      %p79 = pneg %p73
      %p80 = scmp.eq.s32.totalorder %s22, 1
      %p81 = por %p79, %p80
      %p82 = scmp.ne.s32.totalorder %s74, %s77
      %p83 = scmp.eq.s32.totalorder %s22, 0
      %p84 = por %p82, %p83
      %p85 = scmp.ne.s32.totalorder %s74, %s77
      %p86 = scmp.eq.s32.totalorder %s27, 1
      %p87 = por %p85, %p86
      %p88 = scmp.ne.s32.totalorder %s77, %s78
      %p89 = scmp.eq.s32.totalorder %s27, 0
      %p90 = por %p88, %p89
      %p91 = scmp.ne.s32.totalorder %s77, %s78
      %p92 = scmp.eq.s32.totalorder %s28, 1
      %p93 = por %p91, %p92
      %p95 = scmp.ne.s32.totalorder %s78, %s94
      %p96 = scmp.eq.s32.totalorder %s28, 0
      %p97 = por %p95, %p96
      %s98 = ssub.s32 %s29, %s41
      %p99 = scmp.eq.s32.totalorder %s98, 0
      %s101 = sadd.s32 %s100, 1
      %s102 = scalar_select %p99, %s100, %s101
      %p105 = pneg %p99
      %p106 = scmp.eq.s32.totalorder %s22, 1
      %p107 = por %p105, %p106
      %p108 = scmp.ne.s32.totalorder %s100, %s103
      %p109 = scmp.eq.s32.totalorder %s22, 0
      %p110 = por %p108, %p109
      %p111 = scmp.ne.s32.totalorder %s100, %s103
      %p112 = scmp.eq.s32.totalorder %s27, 1
      %p113 = por %p111, %p112
      %p114 = scmp.ne.s32.totalorder %s103, %s104
      %p115 = scmp.eq.s32.totalorder %s27, 0
      %p116 = por %p114, %p115
      %p117 = scmp.ne.s32.totalorder %s103, %s104
      %p118 = scmp.eq.s32.totalorder %s28, 1
      %p119 = por %p117, %p118
      %p121 = scmp.ne.s32.totalorder %s104, %s120
      %p122 = scmp.eq.s32.totalorder %s28, 0
      %p123 = por %p121, %p122
      %s124 = ssub.s32 %s29, %s41
      %p125 = scmp.eq.s32.totalorder %s124, 0
      %s127 = sadd.s32 %s126, 1
      %s128 = scalar_select %p125, %s126, %s127
      %p131 = pneg %p125
      %p132 = scmp.eq.s32.totalorder %s22, 1
      %p133 = por %p131, %p132
      %p134 = scmp.ne.s32.totalorder %s126, %s129
      %p135 = scmp.eq.s32.totalorder %s22, 0
      %p136 = por %p134, %p135
      %p137 = scmp.ne.s32.totalorder %s126, %s129
      %p138 = scmp.eq.s32.totalorder %s27, 1
      %p139 = por %p137, %p138
      %p140 = scmp.ne.s32.totalorder %s129, %s130
      %p141 = scmp.eq.s32.totalorder %s27, 0
      %p142 = por %p140, %p141
      %p143 = scmp.ne.s32.totalorder %s129, %s130
      %p144 = scmp.eq.s32.totalorder %s28, 1
      %p145 = por %p143, %p144
      %p147 = scmp.ne.s32.totalorder %s130, %s146
      %p148 = scmp.eq.s32.totalorder %s28, 0
      %p149 = por %p147, %p148
      %p150 = scmp.le.s32.totalorder 1, %s22
      %p151 = scmp.lt.s32.totalorder %s22, 3
      %p152 = pnand %p150, %p151
      %p153 = pneg %p152
      // Predicated region
      $region9: #{tpu_custom_call.1} parent=5 // pred_check
        _
      $region10: #{tpu_custom_call.1} parent=5 // pred_check_branch
        %155 = sbr.rel (%p152) target = $region12
      $region11: #{tpu_custom_call.1} parent=5 // pred_region
        %s156 = ssub.s32 %s22, 1
      $region12: #{tpu_custom_call.1} parent=5 // pred_fallthru
        _
      %p157 = scmp.lt.s32.totalorder %s22, 2
      // Predicated region
      $region13: #{tpu_custom_call.1} parent=5 // pred_check
        %p158 = pneg %p157
      $region14: #{tpu_custom_call.1} parent=5 // pred_check_branch
        %160 = sbr.rel (%p158) target = $region16
      $region15: #{tpu_custom_call.1} parent=5 // pred_region
        // Predicated region
        $region17: #{tpu_custom_call.1} parent=15 // pred_check
          %p161 = pneg %p56
        $region18: #{tpu_custom_call.1} parent=15 // pred_check_branch
          %163 = sbr.rel (%p161) target = $region20
        $region19: #{tpu_custom_call.1} parent=15 // pred_region
          %s164 = sand.u32 %s46, 1
          %s165 = scalar_lea.sflag [#allocation3], %s164
          %s166 = sand.u32 %s46, 1
          %s167 = smul.addr %s166, 32
          %s168 = scalar_lea.vmem [#allocation2], %s167
          %170 = vsyncadd %s165, 0
          %s171 = smul.addr %s29, 4
          %s172 = sadd.s32 %s30, %s171
          %s173 = smul.addr %s172, 8
          %s174 = scalar_lea.hbm %s0, %s173
          %s175 = sshll.u32 %s174, 4
          %s176 = int_to_ptr.hbm [resolvable:$true] %s175
          %s177 = sshll.u32 %s168, 4
          %s178 = int_to_ptr.vmem [resolvable:$true] %s177
          %183 = dma.hbm_to_vmem [thread:$0]  %s176, 512, %s178, %s165, 128, 128, 8
        $region20: #{tpu_custom_call.1} parent=15 // pred_fallthru
          _
        // Predicated region
        $region21: #{tpu_custom_call.1} parent=15 // pred_check
          %p184 = pneg %p84
        $region22: #{tpu_custom_call.1} parent=15 // pred_check_branch
          %186 = sbr.rel (%p184) target = $region24
        $region23: #{tpu_custom_call.1} parent=15 // pred_region
          %s187 = sand.u32 %s74, 1
          %s188 = scalar_lea.sflag [#allocation6], %s187
          %s189 = sand.u32 %s74, 1
          %s190 = smul.addr %s189, 8
          %s191 = scalar_lea.vmem [#allocation5], %s190
          %193 = vsyncadd %s188, 0
          %s194 = sadd.s32 %s30, %s29
          %s195 = smul.addr %s194, 8
          %s196 = scalar_lea.hbm %s1, %s195
          %s198 = sshll.u32 %s196, 4
          %s199 = int_to_ptr.hbm [resolvable:$true] %s198
          %s200 = sshll.u32 %s191, 4
          %s201 = int_to_ptr.vmem [resolvable:$true] %s200
          %203 = dma.hbm_to_vmem [thread:$0]  %s199, 128, %s201, %s188
        $region24: #{tpu_custom_call.1} parent=15 // pred_fallthru
          _
      $region16: #{tpu_custom_call.1} parent=5 // pred_fallthru
        _
      %p204 = scmp.le.s32.totalorder 1, %s22
      %p205 = scmp.lt.s32.totalorder %s22, 3
      %p206 = pnand %p204, %p205
      %p207 = pneg %p206
      // Predicated region
      $region25: #{tpu_custom_call.1} parent=5 // pred_check
        _
      $region26: #{tpu_custom_call.1} parent=5 // pred_check_branch
        %209 = sbr.rel (%p206) target = $region28
      $region27: #{tpu_custom_call.1} parent=5 // pred_region
        %s210 = ssub.s32 %s22, 1
        %s211 = sand.u32 %s49, 1
        %s212 = scalar_lea.sflag [#allocation3], %s211
        %s213 = sand.u32 %s49, 1
        %s214 = smul.addr %s213, 32
        %s215 = scalar_lea.vmem [#allocation2], %s214
        // Predicated region
        $region29: #{tpu_custom_call.1} parent=27 // pred_check
          %p216 = pneg %p62
        $region30: #{tpu_custom_call.1} parent=27 // pred_check_branch
          %218 = sbr.rel (%p216) target = $region32
        $region31: #{tpu_custom_call.1} parent=27 // pred_region
          %220 = dma.done %s212, 512
        $region32: #{tpu_custom_call.1} parent=27 // pred_fallthru
          _
        %s221 = sand.u32 %s77, 1
        %s222 = scalar_lea.sflag [#allocation6], %s221
        %s223 = sand.u32 %s77, 1
        %s224 = smul.addr %s223, 8
        %s225 = scalar_lea.vmem [#allocation5], %s224
        // Predicated region
        $region33: #{tpu_custom_call.1} parent=27 // pred_check
          %p226 = pneg %p90
        $region34: #{tpu_custom_call.1} parent=27 // pred_check_branch
          %228 = sbr.rel (%p226) target = $region36
        $region35: #{tpu_custom_call.1} parent=27 // pred_region
          %230 = dma.done %s222, 128
        $region36: #{tpu_custom_call.1} parent=27 // pred_fallthru
          _
        %s231 = sand.u32 %s49, 1
        %s232 = scalar_lea.sflag [#allocation3], %s231
        %s233 = sand.u32 %s49, 1
        %s234 = smul.addr %s233, 32
        %s235 = scalar_lea.vmem [#allocation2], %s234
        %p236 = pneg %p62
        %p237 = pneg %p59
        %s238 = sand.u32 %s77, 1
        %s239 = scalar_lea.sflag [#allocation6], %s238
        %s240 = sand.u32 %s77, 1
        %s241 = smul.addr %s240, 8
        %s242 = scalar_lea.vmem [#allocation5], %s241
        %p243 = pneg %p90
        %p244 = pneg %p87
        %p245 = pneg %p116
        %p246 = pneg %p113
        %s247 = sand.u32 %s103, 1
        %s248 = scalar_lea.sflag [#allocation4], %s247
        %s249 = sand.u32 %s103, 1
        %s250 = smul.addr %s249, 8
        %s251 = scalar_lea.vmem [#allocation7], %s250
        %p252 = pneg %p142
        %p253 = pneg %p139
        %s254 = sand.u32 %s129, 1
        %s255 = scalar_lea.sflag [#allocation9], %s254
        %s256 = sand.u32 %s129, 1
        %s257 = smul.addr %s256, 8
        %s258 = scalar_lea.vmem [#allocation8], %s257
        %p259 = scmp.eq.s32.totalorder %s32, 0
        // Predicated region
        $region37: #{tpu_custom_call.1} parent=27 // pred_check
          %p260 = pneg %p259
        $region38: #{tpu_custom_call.1} parent=27 // pred_check_branch
          %262 = sbr.rel (%p260) target = $region40
        $region39: #{tpu_custom_call.1} parent=27 // pred_region
          %263 = vst [vmem:[%s251] sm:$0xff] 0.0
          %264 = vst [vmem:[%s258] sm:$0xff] 0.0
        $region40: #{tpu_custom_call.1} parent=27 // pred_fallthru
          _
        %v265 = vld [vmem:[%s215] sm:$0xff]
        %v266 = vld [vmem:[%s215 + $0x8] sm:$0xff]
        %v267 = vld [vmem:[%s215 + $0x10] sm:$0xff]
        %v268 = vld [vmem:[%s215 + $0x18] sm:$0xff]
        %v269 = vld [vmem:[%s225] sm:$0xff]
        %v270 = vmax.f32 %v265, %v266
        %v271 = vmax.f32 %v267, %v268
        %v272 = vmax.f32 %v270, %v271
        %v273 = vsub.f32 %v265, %v272
        %v274 = vsub.f32 %v266, %v272
        %v275 = vsub.f32 %v267, %v272
        %v276 = vsub.f32 %v268, %v272
        %v277 = vmul.f32 %v273, 1.442695
        %v278 = vpow.pop %v277
        %v279 = vmul.f32 %v274, 1.442695
        %v280 = vpow.pop %v279
        %v281 = vmul.f32 %v275, 1.442695
        %v282 = vpow.pop %v281
        %v283 = vmul.f32 %v276, 1.442695
        %v284 = vpow.pop %v283
        %v285 = vadd.f32 %v278, %v280
        %v286 = vadd.f32 %v285, %v282
        %v287 = vadd.f32 %v286, %v284
        %v288 = vlog2.pop %v287
        %v289 = vmul.f32 %v288, 0.6931472
        %v290 = vadd.f32 %v272, %v289
        %vm291 = vcmp.eq.s32.totalorder %v269, 0
        %vm292 = vcmp.eq.s32.totalorder %v269, 1
        %vm293 = vcmp.eq.s32.totalorder %v269, 2
        %vm294 = vcmp.eq.s32.totalorder %v269, 3
        %v295 = vsel %vm291, %v265, 0.0
        %v296 = vsel %vm292, %v266, 0.0
        %v297 = vsel %vm293, %v267, 0.0
        %v298 = vsel %vm294, %v268, 0.0
        %v299 = vadd.f32 %v295, %v296
        %v300 = vadd.f32 %v299, %v297
        %v301 = vadd.f32 %v300, %v298
        %v302 = vsub.f32 %v290, %v301
        %v303 = vlaneseq
        %v304 = vshrl.u32 %v303, 7
        %v305 = vlaneseq
        %v306 = vand.u32 %v305, 127
        %s307 = smul.u32 %s32, 8
        %v308 = vstv %s307
        %v309 = vadd.s32 %v308, %v304
        %v310 = vmul.u32 %v309, 128
        %v311 = vadd.s32 %v310, %v306
        %vm312 = vcmp.ne.s32.totalorder %v269, 255
        %vm313 = vcmp.lt.s32.totalorder %v311, 256
        %vm314 = vmand %vm312, %vm313
        %v315 = vsel %vm314, %v302, 0.0
        %v316 = vsel %vm314, 1, 0
        %v317 = vcvt.s32.f32 %v316
        %v318 = vld [vmem:[%s251] sm:$0xff]
        %v319 = vadd.f32 %v315, 0.0
        %v320 = vadd.f32 %v318, %v319
        %321 = vst [vmem:[%s251] sm:$0xff] %v320
        %v322 = vld [vmem:[%s258] sm:$0xff]
        %v323 = vadd.f32 %v317, 0.0
        %v324 = vadd.f32 %v322, %v323
        %325 = vst [vmem:[%s258] sm:$0xff] %v324
        %s326 = sand.u32 %s103, 1
        %s327 = scalar_lea.sflag [#allocation4], %s326
        %s328 = sand.u32 %s103, 1
        %s329 = smul.addr %s328, 8
        %s330 = scalar_lea.vmem [#allocation7], %s329
        %s331 = sand.u32 %s129, 1
        %s332 = scalar_lea.sflag [#allocation9], %s331
        %s333 = sand.u32 %s129, 1
        %s334 = smul.addr %s333, 8
        %s335 = scalar_lea.vmem [#allocation8], %s334
        // Predicated region
        $region41: #{tpu_custom_call.1} parent=27 // pred_check
          %p336 = pneg %p113
        $region42: #{tpu_custom_call.1} parent=27 // pred_check_branch
          %338 = sbr.rel (%p336) target = $region44
        $region43: #{tpu_custom_call.1} parent=27 // pred_region
          %340 = vsyncadd %s327, 0
          %s341 = smul.addr %s31, 8
          %s342 = scalar_lea.hbm %s2, %s341
          %s344 = sshll.u32 %s330, 4
          %s345 = int_to_ptr.vmem [resolvable:$true] %s344
          %s346 = sshll.u32 %s342, 4
          %s347 = int_to_ptr.hbm [resolvable:$true] %s346
          %349 = dma.vmem_to_hbm [thread:$0]  %s345, 128, %s347, %s327
        $region44: #{tpu_custom_call.1} parent=27 // pred_fallthru
          _
        // Predicated region
        $region45: #{tpu_custom_call.1} parent=27 // pred_check
          %p350 = pneg %p139
        $region46: #{tpu_custom_call.1} parent=27 // pred_check_branch
          %352 = sbr.rel (%p350) target = $region48
        $region47: #{tpu_custom_call.1} parent=27 // pred_region
          %354 = vsyncadd %s332, 0
          %s355 = smul.addr %s31, 8
          %s356 = scalar_lea.hbm %s3, %s355
          %s358 = sshll.u32 %s335, 4
          %s359 = int_to_ptr.vmem [resolvable:$true] %s358
          %s360 = sshll.u32 %s356, 4
          %s361 = int_to_ptr.hbm [resolvable:$true] %s360
          %363 = dma.vmem_to_hbm [thread:$0]  %s359, 128, %s361, %s332
        $region48: #{tpu_custom_call.1} parent=27 // pred_fallthru
          _
      $region28: #{tpu_custom_call.1} parent=5 // pred_fallthru
        _
      %p364 = scmp.le.s32.totalorder 2, %s22
      // Predicated region
      $region49: #{tpu_custom_call.1} parent=5 // pred_check
        %p365 = pneg %p364
      $region50: #{tpu_custom_call.1} parent=5 // pred_check_branch
        %367 = sbr.rel (%p365) target = $region52
      $region51: #{tpu_custom_call.1} parent=5 // pred_region
        %s368 = ssub.s32 %s22, 2
        // Predicated region
        $region53: #{tpu_custom_call.1} parent=51 // pred_check
          %p369 = pneg %p119
        $region54: #{tpu_custom_call.1} parent=51 // pred_check_branch
          %371 = sbr.rel (%p369) target = $region56
        $region55: #{tpu_custom_call.1} parent=51 // pred_region
          %s372 = sand.u32 %s104, 1
          %s373 = scalar_lea.sflag [#allocation4], %s372
          %s374 = sand.u32 %s104, 1
          %s375 = smul.addr %s374, 8
          %s376 = scalar_lea.vmem [#allocation7], %s375
          %378 = dma.done %s373, 128
        $region56: #{tpu_custom_call.1} parent=51 // pred_fallthru
          _
        // Predicated region
        $region57: #{tpu_custom_call.1} parent=51 // pred_check
          %p379 = pneg %p145
        $region58: #{tpu_custom_call.1} parent=51 // pred_check_branch
          %381 = sbr.rel (%p379) target = $region60
        $region59: #{tpu_custom_call.1} parent=51 // pred_region
          %s382 = sand.u32 %s130, 1
          %s383 = scalar_lea.sflag [#allocation9], %s382
          %s384 = sand.u32 %s130, 1
          %s385 = smul.addr %s384, 8
          %s386 = scalar_lea.vmem [#allocation8], %s385
          %388 = dma.done %s383, 128
        $region60: #{tpu_custom_call.1} parent=51 // pred_fallthru
          _
      $region52: #{tpu_custom_call.1} parent=5 // pred_fallthru
        _
    $region6: #{tpu_custom_call.1} parent=1 // loop_footer
      %s26 = sadd.s32 1, %s22
    $region7: #{tpu_custom_call.1} parent=1 // loop_footer_branch
      %21 = sbr.rel target = $region3
    $region8: #{tpu_custom_call.1} parent=1 // loop_exit
      _
    %389 = vsyncpa [#allocation3], 1
    %s390 = scalar_lea.sflag [#allocation3], 1
    %391 = vsyncpa %s390, 1
    %392 = vsyncpa [#allocation6], 1
    %s393 = scalar_lea.sflag [#allocation6], 1
    %394 = vsyncpa %s393, 1
    %395 = vsyncpa [#allocation4], 1
    %s396 = scalar_lea.sflag [#allocation4], 1
    %397 = vsyncpa %s396, 1
    %398 = vsyncpa [#allocation9], 1
    %s399 = scalar_lea.sflag [#allocation9], 1
    %400 = vsyncpa %s399, 1

</llo_original>
